<compile_context>
chip_gen: v7x
topology: tpu7x:2x2x1
jax: 0.10.0
libtpu: 0.0.40
codegen_flags: <defaults>
</compile_context>

<pallas_src>
import functools

import jax
import jax.numpy as jnp
from jax import lax
from jax.experimental import pallas as pl
from jax.experimental.pallas import tpu as pltpu


# ---------------------------------------------------------------------------
# Generation-tuned VMEM policy
# ---------------------------------------------------------------------------
def _tpu_vmem_capacity_bytes():
    """Physical VMEM per TensorCore; conservative fallback if the query fails."""
    try:
        info = pltpu.get_tpu_info()
        cap = getattr(info, "vmem_capacity_bytes", None)
        if cap:
            return int(cap)
    except Exception:
        pass
    return 64 * 1024 * 1024          # v7x-sized fallback (safe lower bound everywhere)


def _vmem_policy():
    """Returns (vmem_limit_bytes, input_budget_bytes, max_tile_n, max_tile_c)."""
    cap = _tpu_vmem_capacity_bytes()
    vmem_limit = min((cap * 3) // 4, 96 * 1024 * 1024)   # ~96 MiB on v5e/v6e, ~48 MiB on v7x
    input_budget = (vmem_limit * 2) // 3                 # headroom for scratch / out / compiler
    if cap >= 96 * 1024 * 1024:                          # v5e / v6e (128 MiB physical)
        max_tile_n, max_tile_c = 2048, 8192
    else:                                                # v7x (64 MiB physical)
        max_tile_n, max_tile_c = 1024, 4096
    return vmem_limit, input_budget, max_tile_n, max_tile_c


def _choose_tiles(n, c, stream_itemsizes, input_budget, max_tile_n, max_tile_c):
    """Pick (tile_n, tile_c) so the double-buffered input streams fit the budget."""
    tile_c = c if c <= max_tile_c else max_tile_c        # full dim, or lane-dense 128-multiple
    row_mult = 8 if min(stream_itemsizes) >= 4 else 16   # sublane packing (bf16 -> 16)
    bytes_per_row = 2 * tile_c * sum(stream_itemsizes)   # 2 = pipeline double-buffers
    tile_n = input_budget // max(bytes_per_row, 1)
    tile_n = int(min(tile_n, max_tile_n, n))
    tile_n = max(row_mult, (tile_n // row_mult) * row_mult)
    if tile_n >= n:
        if n >= 2 * row_mult:
            # Keep >= 2 batch tiles so the "parallel" axis can shard across both
            # TensorCores on v7x; one extra ~0.35us step elsewhere is noise.
            tile_n = (((n + 1) // 2 + row_mult - 1) // row_mult) * row_mult
        else:
            tile_n = n                                   # single full-batch tile (always legal)
    return tile_n, tile_c


# ---------------------------------------------------------------------------
# Kernels: streaming logsumexp over the class axis
# ---------------------------------------------------------------------------
def _online_lse_step(logits, lse_ref, m_ref, l_ref, *, n_classes, mask_cols):
    """One (batch-tile, class-tile) step of streaming logsumexp.

    logits  : (TN, TC) f32 (already perturbed/cast by the caller kernel)
    lse_ref : (TN, 1)  f32 per-row logsumexp output block
    m/l     : (TN, 1)  f32 VMEM scratch: running max, running sum-exp
    """
    j = pl.program_id(1)              # class tile ("arbitrary", innermost)
    tn, tc = logits.shape

    @pl.when(j == 0)
    def _():
        m_ref[...] = jnp.full(m_ref.shape, -jnp.inf, jnp.float32)
        l_ref[...] = jnp.zeros(l_ref.shape, jnp.float32)

    if mask_cols:                     # only compiled in when C % tile_c != 0
        # (1, TC) iota broadcast into the compare -> no (TN, TC) iota materialization.
        class_pos = j * tc + lax.broadcasted_iota(jnp.int32, (1, tc), 1)
        logits = jnp.where(class_pos < n_classes, logits, -jnp.inf)

    # Online logsumexp (flash-style running max / sum-exp).
    m_old = m_ref[...]
    m_new = jnp.maximum(m_old, jnp.max(logits, axis=-1, keepdims=True))
    l_ref[...] = (l_ref[...] * jnp.exp(m_old - m_new)
                  + jnp.sum(jnp.exp(logits - m_new), axis=-1, keepdims=True))
    m_ref[...] = m_new

    @pl.when(j == pl.num_programs(1) - 1)
    def _():
        # Garbage in padded remainder-batch rows stays confined to those rows and
        # is clipped at writeback (output array is exactly (N, 1)).
        lse_ref[...] = m_ref[...] + jnp.log(l_ref[...])


def _robust_lse_kernel(mu_ref, out_ref, pert_ref, lse_ref, m_ref, l_ref, **kw):
    mu = mu_ref[0]                                       # SMEM runtime scalar
    logits = out_ref[...].astype(jnp.float32) + mu * pert_ref[...].astype(jnp.float32)
    _online_lse_step(logits, lse_ref, m_ref, l_ref, **kw)


def _plain_lse_kernel(out_ref, lse_ref, m_ref, l_ref, **kw):
    _online_lse_step(out_ref[...].astype(jnp.float32), lse_ref, m_ref, l_ref, **kw)


# ---------------------------------------------------------------------------
# Wrapper
# ---------------------------------------------------------------------------
def lmt_cross_entropy(output, y, perturbation, *, mu, epoch, robust_starting_epoch):
    """Pallas implementation of LMTCrossEntropy.forward (mean-reduced CE)."""
    n, c = output.shape
    robust = bool(epoch >= robust_starting_epoch)        # host-side branch, as in torch
    mu_val = jnp.asarray(mu, dtype=jnp.float32)

    vmem_limit, input_budget, max_tn, max_tc = _vmem_policy()
    itemsizes = [jnp.dtype(output.dtype).itemsize]
    if robust:                                           # plain CE never streams perturbation
        itemsizes.append(jnp.dtype(perturbation.dtype).itemsize)
    tile_n, tile_c = _choose_tiles(n, c, itemsizes, input_budget, max_tn, max_tc)
    grid = (pl.cdiv(n, tile_n), pl.cdiv(c, tile_c))

    kw = dict(n_classes=c, mask_cols=(c % tile_c != 0))
    out_shape = jax.ShapeDtypeStruct((n, 1), jnp.float32)
    scratch = [pltpu.VMEM((tile_n, 1), jnp.float32),     # running max
               pltpu.VMEM((tile_n, 1), jnp.float32)]     # running sum-exp
    compiler_params = pltpu.CompilerParams(
        dimension_semantics=("parallel", "arbitrary"),
        vmem_limit_bytes=vmem_limit)

    if robust:
        grid_spec = pltpu.PrefetchScalarGridSpec(
            num_scalar_prefetch=1,                       # mu as SMEM scalar: no recompile per epoch
            grid=grid,
            in_specs=[
                pl.BlockSpec((tile_n, tile_c), lambda i, j, mu_ref: (i, j)),  # logits
                pl.BlockSpec((tile_n, tile_c), lambda i, j, mu_ref: (i, j)),  # perturbation
            ],
            out_specs=pl.BlockSpec((tile_n, 1), lambda i, j, mu_ref: (i, 0)),
            scratch_shapes=scratch)
        lse = pl.pallas_call(
            functools.partial(_robust_lse_kernel, **kw),
            out_shape=out_shape, grid_spec=grid_spec,
            compiler_params=compiler_params,
        )(mu_val.reshape(1), output, perturbation)
    else:
        grid_spec = pltpu.PrefetchScalarGridSpec(
            num_scalar_prefetch=0,
            grid=grid,
            in_specs=[pl.BlockSpec((tile_n, tile_c), lambda i, j: (i, j))],   # logits
            out_specs=pl.BlockSpec((tile_n, 1), lambda i, j: (i, 0)),
            scratch_shapes=scratch)
        lse = pl.pallas_call(
            functools.partial(_plain_lse_kernel, **kw),
            out_shape=out_shape, grid_spec=grid_spec,
            compiler_params=compiler_params,
        )(output)

    # Target-class logit gathered once in the wrapper (N elements, trivial XLA
    # gather) and subtracted outside the kernel -> removes the per-class-tile
    # label compare/select/reduce from the streaming loop.
    y_idx = y.astype(jnp.int32)[:, None]
    tgt = jnp.take_along_axis(output, y_idx, axis=-1).astype(jnp.float32)[:, 0]
    if robust:
        tgt = tgt + mu_val * jnp.take_along_axis(
            perturbation, y_idx, axis=-1).astype(jnp.float32)[:, 0]

    return jnp.mean(lse[:, 0] - tgt)                     # mean reduction


if __name__ == "__main__":
    # "Module parameters" from LMTCrossEntropy.__init__ (scheduler/state_dict are
    # host-side Python bookkeeping, not kernel work).
    initial_mu = 0.5
    scheduler_coefficient = 1.1
    maximum_coefficient = 2.0
    robust_starting_epoch = 1

    # Small deterministic inputs: batch N=16, classes C=32.
    key = jax.random.PRNGKey(0)
    k1, k2, k3 = jax.random.split(key, 3)
    N, C = 16, 32
    output = jax.random.normal(k1, (N, C), dtype=jnp.float32)
    perturbation = jax.random.normal(k2, (N, C), dtype=jnp.float32)
    y = jax.random.randint(k3, (N,), 0, C, dtype=jnp.int32)

    # Robust branch (epoch >= robustStartingEpoch): logits = output + mu * perturbation.
    loss_robust = lmt_cross_entropy(output, y, perturbation, mu=initial_mu,
                                    epoch=3, robust_starting_epoch=robust_starting_epoch)
    # Plain branch (epoch < robustStartingEpoch): perturbation never streamed.
    loss_plain = lmt_cross_entropy(output, y, perturbation, mu=initial_mu,
                                   epoch=0, robust_starting_epoch=robust_starting_epoch)
    loss_robust, loss_plain = jax.block_until_ready((loss_robust, loss_plain))

    # Pure-JAX reference check.
    def _ref_ce(logits):
        lse = jax.scipy.special.logsumexp(logits, axis=-1)
        tgt = jnp.take_along_axis(logits, y[:, None], axis=-1)[:, 0]
        return jnp.mean(lse - tgt)

    ref_robust = _ref_ce(output + initial_mu * perturbation)
    ref_plain = _ref_ce(output)
    assert jnp.allclose(loss_robust, ref_robust, atol=1e-5, rtol=1e-5), (loss_robust, ref_robust)
    assert jnp.allclose(loss_plain, ref_plain, atol=1e-5, rtol=1e-5), (loss_plain, ref_plain)

    print("KERNEL_OK")
</pallas_src>

<mosaic_0001>
module attributes {stable_mosaic.version = 11 : i64} {
  func.func @_robust_lse_kernel(%arg0: i32, %arg1: i32, %arg2: memref<1xf32, #tpu.memory_space<smem>>, %arg3: memref<8x32xf32, #tpu.memory_space<vmem>>, %arg4: memref<8x32xf32, #tpu.memory_space<vmem>>, %arg5: memref<8x1xf32, #tpu.memory_space<vmem>>, %arg6: memref<8x1xf32, #tpu.memory_space<vmem>>, %arg7: memref<8x1xf32, #tpu.memory_space<vmem>>) attributes {dimension_semantics = [#tpu.dimension_semantics<parallel>, #tpu.dimension_semantics<arbitrary>], iteration_bounds = array<i64: 2, 1>, scalar_prefetch = 1 : i64, scratch_operands = 2 : i64, tpu.core_type = #tpu.core_type<tc>, window_params = [{transform_indices = @transform_0, window_bounds = array<i64: 8, 32>}, {transform_indices = @transform_1, window_bounds = array<i64: 8, 32>}, {transform_indices = @transform_2, window_bounds = array<i64: 8, 1>}]} {
    %c0 = arith.constant 0 : index
    %0 = memref.load %arg2[%c0] : memref<1xf32, #tpu.memory_space<smem>>
    %c0_0 = arith.constant 0 : index
    %c0_1 = arith.constant 0 : index
    %1 = vector.load %arg3[%c0_0, %c0_1] : memref<8x32xf32, #tpu.memory_space<vmem>>, vector<8x32xf32>
    %c0_2 = arith.constant 0 : index
    %c0_3 = arith.constant 0 : index
    %2 = vector.load %arg4[%c0_2, %c0_3] : memref<8x32xf32, #tpu.memory_space<vmem>>, vector<8x32xf32>
    %3 = vector.broadcast %0 : f32 to vector<8x32xf32>
    %4 = arith.mulf %3, %2 : vector<8x32xf32>
    %5 = arith.addf %1, %4 : vector<8x32xf32>
    %c0_i32 = arith.constant 0 : i32
    %6 = arith.cmpi eq, %arg1, %c0_i32 : i32
    %7 = arith.extui %6 : i1 to i32
    %c0_i32_4 = arith.constant 0 : i32
    %8 = arith.cmpi ne, %7, %c0_i32_4 : i32
    scf.if %8 {
      %cst_16 = arith.constant 0xFF800000 : f32
      %28 = vector.broadcast %cst_16 : f32 to vector<8x1xf32>
      %c0_17 = arith.constant 0 : index
      %c0_18 = arith.constant 0 : index
      %29 = vector.load %arg6[%c0_17, %c0_18] : memref<8x1xf32, #tpu.memory_space<vmem>>, vector<8x1xf32>
      tpu.vector_store %arg6[%c0_17, %c0_18], %28 {strides = array<i32>} : memref<8x1xf32, #tpu.memory_space<vmem>>, vector<8x1xf32>,
      %cst_19 = arith.constant 0.000000e+00 : f32
      %30 = vector.broadcast %cst_19 : f32 to vector<8x1xf32>
      %c0_20 = arith.constant 0 : index
      %c0_21 = arith.constant 0 : index
      %31 = vector.load %arg7[%c0_20, %c0_21] : memref<8x1xf32, #tpu.memory_space<vmem>>, vector<8x1xf32>
      tpu.vector_store %arg7[%c0_20, %c0_21], %30 {strides = array<i32>} : memref<8x1xf32, #tpu.memory_space<vmem>>, vector<8x1xf32>,
    } else {
    }
    %c0_5 = arith.constant 0 : index
    %c0_6 = arith.constant 0 : index
    %9 = vector.load %arg6[%c0_5, %c0_6] : memref<8x1xf32, #tpu.memory_space<vmem>>, vector<8x1xf32>
    %cst = arith.constant dense<0xFF800000> : vector<8xf32>
    %10 = vector.multi_reduction <maximumf>, %5, %cst [1] : vector<8x32xf32> to vector<8xf32>
    %11 = vector.shape_cast %10 : vector<8xf32> to vector<8x1xf32>
    %12 = arith.maximumf %9, %11 : vector<8x1xf32>
    %c0_7 = arith.constant 0 : index
    %c0_8 = arith.constant 0 : index
    %13 = vector.load %arg7[%c0_7, %c0_8] : memref<8x1xf32, #tpu.memory_space<vmem>>, vector<8x1xf32>
    %14 = arith.subf %9, %12 : vector<8x1xf32>
    %15 = math.exp %14 : vector<8x1xf32>
    %16 = arith.mulf %13, %15 : vector<8x1xf32>
    %17 = vector.broadcast %12 : vector<8x1xf32> to vector<8x32xf32>
    %18 = arith.subf %5, %17 : vector<8x32xf32>
    %19 = math.exp %18 : vector<8x32xf32>
    %cst_9 = arith.constant dense<0.000000e+00> : vector<8xf32>
    %20 = vector.multi_reduction <add>, %19, %cst_9 [1] : vector<8x32xf32> to vector<8xf32>
    %21 = vector.shape_cast %20 : vector<8xf32> to vector<8x1xf32>
    %22 = arith.addf %16, %21 : vector<8x1xf32>
    %c0_10 = arith.constant 0 : index
    %c0_11 = arith.constant 0 : index
    %23 = vector.load %arg7[%c0_10, %c0_11] : memref<8x1xf32, #tpu.memory_space<vmem>>, vector<8x1xf32>
    tpu.vector_store %arg7[%c0_10, %c0_11], %22 {strides = array<i32>} : memref<8x1xf32, #tpu.memory_space<vmem>>, vector<8x1xf32>,
    %c0_12 = arith.constant 0 : index
    %c0_13 = arith.constant 0 : index
    %24 = vector.load %arg6[%c0_12, %c0_13] : memref<8x1xf32, #tpu.memory_space<vmem>>, vector<8x1xf32>
    tpu.vector_store %arg6[%c0_12, %c0_13], %12 {strides = array<i32>} : memref<8x1xf32, #tpu.memory_space<vmem>>, vector<8x1xf32>,
    %c0_i32_14 = arith.constant 0 : i32
    %25 = arith.cmpi eq, %arg1, %c0_i32_14 : i32
    %26 = arith.extui %25 : i1 to i32
    %c0_i32_15 = arith.constant 0 : i32
    %27 = arith.cmpi ne, %26, %c0_i32_15 : i32
    scf.if %27 {
      %c0_16 = arith.constant 0 : index
      %c0_17 = arith.constant 0 : index
      %28 = vector.load %arg6[%c0_16, %c0_17] : memref<8x1xf32, #tpu.memory_space<vmem>>, vector<8x1xf32>
      %c0_18 = arith.constant 0 : index
      %c0_19 = arith.constant 0 : index
      %29 = vector.load %arg7[%c0_18, %c0_19] : memref<8x1xf32, #tpu.memory_space<vmem>>, vector<8x1xf32>
      %30 = math.log %29 : vector<8x1xf32>
      %31 = arith.addf %28, %30 : vector<8x1xf32>
      %c0_20 = arith.constant 0 : index
      %c0_21 = arith.constant 0 : index
      %32 = vector.load %arg5[%c0_20, %c0_21] : memref<8x1xf32, #tpu.memory_space<vmem>>, vector<8x1xf32>
      tpu.vector_store %arg5[%c0_20, %c0_21], %31 {strides = array<i32>} : memref<8x1xf32, #tpu.memory_space<vmem>>, vector<8x1xf32>,
    } else {
    }
    return
  }
  func.func @transform_0(%arg0: i32, %arg1: i32, %arg2: memref<1xf32, #tpu.memory_space<smem>>) -> (i32, i32) {
    %c0_i32 = arith.constant 0 : i32
    return %arg0, %arg1 : i32, i32
  }
  func.func @transform_1(%arg0: i32, %arg1: i32, %arg2: memref<1xf32, #tpu.memory_space<smem>>) -> (i32, i32) {
    %c0_i32 = arith.constant 0 : i32
    return %arg0, %arg1 : i32, i32
  }
  func.func @transform_2(%arg0: i32, %arg1: i32, %arg2: memref<1xf32, #tpu.memory_space<smem>>) -> (i32, i32) {
    %c0_i32 = arith.constant 0 : i32
    %c0_i32_0 = arith.constant 0 : i32
    return %arg0, %c0_i32 : i32, i32
  }
}

</mosaic_0001>

<llo_original>
// kernel: tpu_custom_call.1
$region0: #{tpu_custom_call.1}
  #allocation0 [shape = 'u32[]', space=smem, size = 0x4, offset = 0x4, fixed_abs, tag = 'smem constant byte address 0x4 - core index']
  #allocation1 [shape = 'u32[144,128]{1,0:T(1,128)}', space=vmem, size = 0x12000, scoped, tag = 'internal scratch']
  #allocation2 [shape = 'f32[8,1]{1,0:T(8,128)}', space=vmem, size = 0x1000, scoped, tag = 'scratch operand']
  #allocation3 [shape = 'f32[8,1]{1,0:T(8,128)}', space=vmem, size = 0x1000, scoped, tag = 'scratch operand']
  #allocation4 [shape = 's32[1]{0}', space=sflag, size = 0x4, scoped, tag = 'scoped memory for tpu_custom_call.1']
  #allocation5 [shape = 'f32[1]{0:T(128)S(6)}', space=smem, size = 0x200, scoped, tag = 'prefetched SMEM operand 0']
  %s0 = inlined_call_operand.<no memory space> [shape: f32[1], index: 0, kind: input, shape index: {}]
  %s1 = inlined_call_operand.hbm [shape: f32[16,32], index: 1, kind: input, shape index: {}]
  %s2 = inlined_call_operand.hbm [shape: f32[16,32], index: 2, kind: input, shape index: {}]
  %s3 = inlined_call_operand.vmem [shape: f32[16,1], index: 3, kind: output, shape index: {}]
  %s4 = sld [smem:[#allocation0]]
  $region57: #{tpu_custom_call.1} parent=0
    _
  %s6 = ssub.s32 1, %s4
  %s7 = scalar_select 0, %s6, %s4
  %8 = sst [smem:[#allocation5]] %s0
  $region1: #{tpu_custom_call.1} parent=0
    #allocation6 [shape = 'u8[8192]{0}', space=vmem, size = 0x2000, scoped, tag = 'input window, operand 1']
    #allocation7 [shape = 's32[2]{0}', space=sflag, size = 0x8, scoped, tag = 'scoped memory for tpu_custom_call.1']
    #allocation8 [shape = 'u8[8192]{0}', space=vmem, size = 0x2000, scoped, tag = 'input window, operand 2']
    #allocation9 [shape = 's32[2]{0}', space=sflag, size = 0x8, scoped, tag = 'scoped memory for tpu_custom_call.1']
    %9 = vsyncpa [#allocation7], 0
    %s10 = scalar_lea.sflag [#allocation7], 1
    %11 = vsyncpa %s10, 0
    %12 = vsyncpa [#allocation9], 0
    %s13 = scalar_lea.sflag [#allocation9], 1
    %14 = vsyncpa %s13, 0
    loop: start=0, step=1, limit=4
    $region2: #{tpu_custom_call.1} parent=1 // loop_pre_header
      _
    $region3: #{tpu_custom_call.1} parent=1 // loop_header
      %s16 = sphi 0, %s20
      %p17 = scmp.ge.s32.totalorder %s16, 4
      %s23 = sphi 0, %s35
      %s24 = sphi 0, %s31
      %s25 = sphi 0, %s23
      %s26 = sphi 0, %s24
      %s27 = sphi 0, %s25
      %s28 = sphi 0, %s26
      %s40 = sphi 0, %s42
      %s43 = sphi 0, %s40
      %s44 = sphi 0, %s43
      %s60 = sphi 0, %s44
      %s68 = sphi 0, %s70
      %s71 = sphi 0, %s68
      %s72 = sphi 0, %s71
      %s88 = sphi 0, %s72
      %s94 = sphi 0, %s96
      %s97 = sphi 0, %s94
      %s98 = sphi 0, %s97
      %s114 = sphi 0, %s98
    $region4: #{tpu_custom_call.1} parent=1 // loop_header_branch
      %19 = sbr.rel (%p17) target = $region8
    $region5: #{tpu_custom_call.1} parent=1 // loop_body
      %s21 = ssub.s32 %s16, 1
      %s22 = ssub.s32 %s16, 2
      %s29 = sadd.s32 1, %s24
      %p30 = scmp.ge.s32.totalorder %s29, 1
      %s31 = scalar_select %p30, 0, %s29
      %s32 = sadd.s32 1, %s23
      %s33 = scalar_select %p30, %s32, %s23
      %p34 = scmp.ge.s32.totalorder %s33, 2
      %s35 = scalar_select %p34, 0, %s33
      %s36 = ssub.s32 %s23, %s35
      %s37 = ssub.s32 %s24, %s31
      %s38 = sor.u32 %s36, %s37
      %p39 = scmp.eq.s32.totalorder %s38, 0
      %s41 = sadd.s32 %s40, 1
      %s42 = scalar_select %p39, %s40, %s41
      %p45 = pneg %p39
      %p46 = scmp.eq.s32.totalorder %s16, 1
      %p47 = por %p45, %p46
      %p48 = scmp.ne.s32.totalorder %s40, %s43
      %p49 = scmp.eq.s32.totalorder %s16, 0
      %p50 = por %p48, %p49
      %p51 = scmp.ne.s32.totalorder %s40, %s43
      %p52 = scmp.eq.s32.totalorder %s21, 1
      %p53 = por %p51, %p52
      %p54 = scmp.ne.s32.totalorder %s43, %s44
      %p55 = scmp.eq.s32.totalorder %s21, 0
      %p56 = por %p54, %p55
      %p57 = scmp.ne.s32.totalorder %s43, %s44
      %p58 = scmp.eq.s32.totalorder %s22, 1
      %p59 = por %p57, %p58
      %p61 = scmp.ne.s32.totalorder %s44, %s60
      %p62 = scmp.eq.s32.totalorder %s22, 0
      %p63 = por %p61, %p62
      %s64 = ssub.s32 %s23, %s35
      %s65 = ssub.s32 %s24, %s31
      %s66 = sor.u32 %s64, %s65
      %p67 = scmp.eq.s32.totalorder %s66, 0
      %s69 = sadd.s32 %s68, 1
      %s70 = scalar_select %p67, %s68, %s69
      %p73 = pneg %p67
      %p74 = scmp.eq.s32.totalorder %s16, 1
      %p75 = por %p73, %p74
      %p76 = scmp.ne.s32.totalorder %s68, %s71
      %p77 = scmp.eq.s32.totalorder %s16, 0
      %p78 = por %p76, %p77
      %p79 = scmp.ne.s32.totalorder %s68, %s71
      %p80 = scmp.eq.s32.totalorder %s21, 1
      %p81 = por %p79, %p80
      %p82 = scmp.ne.s32.totalorder %s71, %s72
      %p83 = scmp.eq.s32.totalorder %s21, 0
      %p84 = por %p82, %p83
      %p85 = scmp.ne.s32.totalorder %s71, %s72
      %p86 = scmp.eq.s32.totalorder %s22, 1
      %p87 = por %p85, %p86
      %p89 = scmp.ne.s32.totalorder %s72, %s88
      %p90 = scmp.eq.s32.totalorder %s22, 0
      %p91 = por %p89, %p90
      %s92 = ssub.s32 %s23, %s35
      %p93 = scmp.eq.s32.totalorder %s92, 0
      %s95 = sadd.s32 %s94, 1
      %s96 = scalar_select %p93, %s94, %s95
      %p99 = pneg %p93
      %p100 = scmp.eq.s32.totalorder %s16, 1
      %p101 = por %p99, %p100
      %p102 = scmp.ne.s32.totalorder %s94, %s97
      %p103 = scmp.eq.s32.totalorder %s16, 0
      %p104 = por %p102, %p103
      %p105 = scmp.ne.s32.totalorder %s94, %s97
      %p106 = scmp.eq.s32.totalorder %s21, 1
      %p107 = por %p105, %p106
      %p108 = scmp.ne.s32.totalorder %s97, %s98
      %p109 = scmp.eq.s32.totalorder %s21, 0
      %p110 = por %p108, %p109
      %p111 = scmp.ne.s32.totalorder %s97, %s98
      %p112 = scmp.eq.s32.totalorder %s22, 1
      %p113 = por %p111, %p112
      %p115 = scmp.ne.s32.totalorder %s98, %s114
      %p116 = scmp.eq.s32.totalorder %s22, 0
      %p117 = por %p115, %p116
      %p118 = scmp.le.s32.totalorder 1, %s16
      %p119 = scmp.lt.s32.totalorder %s16, 3
      %p120 = pnand %p118, %p119
      %p121 = pneg %p120
      // Predicated region
      $region9: #{tpu_custom_call.1} parent=5 // pred_check
        _
      $region10: #{tpu_custom_call.1} parent=5 // pred_check_branch
        %123 = sbr.rel (%p120) target = $region12
      $region11: #{tpu_custom_call.1} parent=5 // pred_region
        %s124 = ssub.s32 %s16, 1
      $region12: #{tpu_custom_call.1} parent=5 // pred_fallthru
        _
      %p125 = scmp.lt.s32.totalorder %s16, 2
      // Predicated region
      $region13: #{tpu_custom_call.1} parent=5 // pred_check
        %p126 = pneg %p125
      $region14: #{tpu_custom_call.1} parent=5 // pred_check_branch
        %128 = sbr.rel (%p126) target = $region16
      $region15: #{tpu_custom_call.1} parent=5 // pred_region
        // Predicated region
        $region17: #{tpu_custom_call.1} parent=15 // pred_check
          %p129 = pneg %p50
        $region18: #{tpu_custom_call.1} parent=15 // pred_check_branch
          %131 = sbr.rel (%p129) target = $region20
        $region19: #{tpu_custom_call.1} parent=15 // pred_region
          %s132 = sand.u32 %s40, 1
          %s133 = scalar_lea.sflag [#allocation7], %s132
          %s134 = sand.u32 %s40, 1
          %s135 = smul.addr %s134, 8
          %s136 = scalar_lea.vmem [#allocation6], %s135
          %s138 = ssub.s32 128, 128
          %139 = vsyncadd %s133, %s138
          %s140 = sadd.s32 %s24, %s23
          %s141 = smul.addr %s140, 128
          %s142 = scalar_lea.hbm %s1, %s141
          %s144 = sshll.u32 %s136, 4
          %s145 = int_to_ptr.vmem [resolvable:$true] %s144
          %147 = dma.hbm_to_vmem [thread:$0]  %s142, 128, %s145, %s133
        $region20: #{tpu_custom_call.1} parent=15 // pred_fallthru
          _
        // Predicated region
        $region21: #{tpu_custom_call.1} parent=15 // pred_check
          %p148 = pneg %p78
        $region22: #{tpu_custom_call.1} parent=15 // pred_check_branch
          %150 = sbr.rel (%p148) target = $region24
        $region23: #{tpu_custom_call.1} parent=15 // pred_region
          %s151 = sand.u32 %s68, 1
          %s152 = scalar_lea.sflag [#allocation9], %s151
          %s153 = sand.u32 %s68, 1
          %s154 = smul.addr %s153, 8
          %s155 = scalar_lea.vmem [#allocation8], %s154
          %s157 = ssub.s32 128, 128
          %158 = vsyncadd %s152, %s157
          %s159 = sadd.s32 %s24, %s23
          %s160 = smul.addr %s159, 128
          %s161 = scalar_lea.hbm %s2, %s160
          %s163 = sshll.u32 %s155, 4
          %s164 = int_to_ptr.vmem [resolvable:$true] %s163
          %166 = dma.hbm_to_vmem [thread:$0]  %s161, 128, %s164, %s152
        $region24: #{tpu_custom_call.1} parent=15 // pred_fallthru
          _
      $region16: #{tpu_custom_call.1} parent=5 // pred_fallthru
        _
      %p167 = scmp.le.s32.totalorder 1, %s16
      %p168 = scmp.lt.s32.totalorder %s16, 3
      %p169 = pnand %p167, %p168
      %p170 = pneg %p169
      // Predicated region
      $region25: #{tpu_custom_call.1} parent=5 // pred_check
        _
      $region26: #{tpu_custom_call.1} parent=5 // pred_check_branch
        %172 = sbr.rel (%p169) target = $region28
      $region27: #{tpu_custom_call.1} parent=5 // pred_region
        %s173 = ssub.s32 %s16, 1
        %s174 = sand.u32 %s43, 1
        %s175 = scalar_lea.sflag [#allocation7], %s174
        %s176 = sand.u32 %s43, 1
        %s177 = smul.addr %s176, 8
        %s178 = scalar_lea.vmem [#allocation6], %s177
        // Predicated region
        $region29: #{tpu_custom_call.1} parent=27 // pred_check
          %p179 = pneg %p56
        $region30: #{tpu_custom_call.1} parent=27 // pred_check_branch
          %181 = sbr.rel (%p179) target = $region32
        $region31: #{tpu_custom_call.1} parent=27 // pred_region
          %182 = dma.done %s175, 128
        $region32: #{tpu_custom_call.1} parent=27 // pred_fallthru
          _
        %s183 = sand.u32 %s71, 1
        %s184 = scalar_lea.sflag [#allocation9], %s183
        %s185 = sand.u32 %s71, 1
        %s186 = smul.addr %s185, 8
        %s187 = scalar_lea.vmem [#allocation8], %s186
        // Predicated region
        $region33: #{tpu_custom_call.1} parent=27 // pred_check
          %p188 = pneg %p84
        $region34: #{tpu_custom_call.1} parent=27 // pred_check_branch
          %190 = sbr.rel (%p188) target = $region36
        $region35: #{tpu_custom_call.1} parent=27 // pred_region
          %191 = dma.done %s184, 128
        $region36: #{tpu_custom_call.1} parent=27 // pred_fallthru
          _
        %s192 = sand.u32 %s43, 1
        %s193 = scalar_lea.sflag [#allocation7], %s192
        %s194 = sand.u32 %s43, 1
        %s195 = smul.addr %s194, 8
        %s196 = scalar_lea.vmem [#allocation6], %s195
        %p197 = pneg %p56
        %p198 = pneg %p53
        %s199 = sand.u32 %s71, 1
        %s200 = scalar_lea.sflag [#allocation9], %s199
        %s201 = sand.u32 %s71, 1
        %s202 = smul.addr %s201, 8
        %s203 = scalar_lea.vmem [#allocation8], %s202
        %p204 = pneg %p84
        %p205 = pneg %p81
        %p206 = pneg %p110
        %p207 = pneg %p107
        %p208 = scmp.lt.s32.totalorder %s25, 1
        %s209 = scalar_select %p208, %s25, 1
        %s210 = smul.addr %s209, 8
        %s211 = scalar_lea.vmem %s3, %s210
        %p212 = scmp.lt.s32.totalorder %s25, 1
        %s213 = scalar_select %p212, %s25, 1
        %s214 = smul.addr %s213, 8
        %s215 = scalar_lea.vmem %s3, %s214
        %s216 = sld [smem:[#allocation5]]
        %v217 = vld [vmem:[%s178] sm:$0xff]
        %v218 = vld [vmem:[%s187] sm:$0xff]
        %v219 = vstv %s216
        %v220 = vmul.f32 %v219, %v218
        %v221 = vadd.f32 %v217, %v220
        %p222 = scmp.eq.s32.totalorder %s26, 0
        // Predicated region
        $region37: #{tpu_custom_call.1} parent=27 // pred_check
          %p223 = pneg %p222
        $region38: #{tpu_custom_call.1} parent=27 // pred_check_branch
          %225 = sbr.rel (%p223) target = $region40
        $region39: #{tpu_custom_call.1} parent=27 // pred_region
          %vm226 = vcmask 7168
          %227 = vst.msk [vmem:[#allocation2] sm:$0xff] %vm226, -inf
          %228 = vst.msk [vmem:[#allocation3] sm:$0xff] %vm226, 0.0
        $region40: #{tpu_custom_call.1} parent=27 // pred_fallthru
          _
        %v229 = vld [vmem:[#allocation2] sm:$0xff]
        %vm230 = vcmask 261120
        %v231 = vsel %vm230, %v221, -inf
        %232 = vmax.xlane.f32.xlu0 %v231
        %v233 = vpop.xlane.xlu0 %232
        %v234 = vmax.f32 %v229, %v233
        %v235 = vld [vmem:[#allocation3] sm:$0xff]
        %v236 = vsub.f32 %v229, %v234
        %v237 = vmul.f32 %v236, 1.442695
        %v238 = vpow.pop %v237
        %v239 = vmul.f32 %v235, %v238
        %241 = vset.pattern.permute.xlu0 0
        %242 = vperm.xlu0 %241, %v234
        %v243 = vpop.permute.xlu0 %242
        %v245 = vsub.f32 %v221, %v243
        %v246 = vmul.f32 %v245, 1.442695
        %v247 = vpow.pop %v246
        %v248 = vsel %vm230, %v247, 0.0
        %249 = vadd.xlane.f32.xlu0 %v248
        %v250 = vpop.xlane.xlu0 %249
        %v251 = vadd.f32 %v239, %v250
        %vm252 = vcmask 7168
        %253 = vst.msk [vmem:[#allocation3] sm:$0xff] %vm252, %v251
        %254 = vst.msk [vmem:[#allocation2] sm:$0xff] %vm252, %v234
        // Predicated region
        $region41: #{tpu_custom_call.1} parent=27 // pred_check
          %p255 = pneg %p222
        $region42: #{tpu_custom_call.1} parent=27 // pred_check_branch
          %257 = sbr.rel (%p255) target = $region44
        $region43: #{tpu_custom_call.1} parent=27 // pred_region
          %v258 = vld [vmem:[#allocation2] sm:$0xff]
          %v259 = vld [vmem:[#allocation3] sm:$0xff]
          %v260 = vlog2.pop %v259
          %v261 = vmul.f32 %v260, 0.6931472
          %v262 = vadd.f32 %v258, %v261
          %263 = vst.msk [vmem:[%s215] sm:$0xff] %vm252, %v262
        $region44: #{tpu_custom_call.1} parent=27 // pred_fallthru
          _
        %p264 = scmp.lt.s32.totalorder %s25, 1
        %s265 = scalar_select %p264, %s25, 1
        %s266 = smul.addr %s265, 8
        %s267 = scalar_lea.vmem %s3, %s266
        // Predicated region
        $region45: #{tpu_custom_call.1} parent=27 // pred_check
          %p268 = pneg %p107
        $region46: #{tpu_custom_call.1} parent=27 // pred_check_branch
          %270 = sbr.rel (%p268) target = $region48
        $region47: #{tpu_custom_call.1} parent=27 // pred_region
          _
        $region48: #{tpu_custom_call.1} parent=27 // pred_fallthru
          _
      $region28: #{tpu_custom_call.1} parent=5 // pred_fallthru
        _
      %p271 = scmp.le.s32.totalorder 2, %s16
      // Predicated region
      $region49: #{tpu_custom_call.1} parent=5 // pred_check
        %p272 = pneg %p271
      $region50: #{tpu_custom_call.1} parent=5 // pred_check_branch
        %274 = sbr.rel (%p272) target = $region52
      $region51: #{tpu_custom_call.1} parent=5 // pred_region
        %s275 = ssub.s32 %s16, 2
        // Predicated region
        $region53: #{tpu_custom_call.1} parent=51 // pred_check
          %p276 = pneg %p113
        $region54: #{tpu_custom_call.1} parent=51 // pred_check_branch
          %278 = sbr.rel (%p276) target = $region56
        $region55: #{tpu_custom_call.1} parent=51 // pred_region
          %p279 = scmp.lt.s32.totalorder %s27, 1
          %s280 = scalar_select %p279, %s27, 1
          %s281 = smul.addr %s280, 8
          %s282 = scalar_lea.vmem %s3, %s281
        $region56: #{tpu_custom_call.1} parent=51 // pred_fallthru
          _
      $region52: #{tpu_custom_call.1} parent=5 // pred_fallthru
        _
    $region6: #{tpu_custom_call.1} parent=1 // loop_footer
      %s20 = sadd.s32 1, %s16
    $region7: #{tpu_custom_call.1} parent=1 // loop_footer_branch
      %15 = sbr.rel target = $region3
    $region8: #{tpu_custom_call.1} parent=1 // loop_exit
      _
    %283 = vsyncpa [#allocation7], 1
    %s284 = scalar_lea.sflag [#allocation7], 1
    %285 = vsyncpa %s284, 1
    %286 = vsyncpa [#allocation9], 1
    %s287 = scalar_lea.sflag [#allocation9], 1
    %288 = vsyncpa %s287, 1

</llo_original>
